<compile_context>
chip_gen: v6e
topology: v6e:2x2x1
jax: 0.10.0
libtpu: 0.0.40
codegen_flags: <defaults>
</compile_context>

<pallas_src>
import functools

import jax
import jax.numpy as jnp
from jax.experimental import pallas as pl
from jax.experimental.pallas import tpu as pltpu


def _round_up(x, m):
    return (x + m - 1) // m * m


# ----------------------------- kernel ---------------------------------------
def _stack_kernel(x_ref, mask_ref, hsel_ref, w_ref, b_ref, o_ref, h_ref, *,
                  nhead, eps, E, F, off_qkv, off_wo, off_w1, off_w2):
    """One encoder layer per grid step; activations resident in h_ref (VMEM)."""
    layer = pl.program_id(0)
    n_layers = pl.num_programs(0)

    N = h_ref.shape[0]                       # N = S * B token rows
    hd = E // nhead
    scale = 1.0 / float(hd) ** 0.5
    f32 = jnp.float32
    bf16 = jnp.bfloat16

    # Layer 0: bring the activations into the resident VMEM scratch.
    @pl.when(layer == 0)
    def _():
        h_ref[...] = x_ref[...]

    x = h_ref[...]                           # (N, E) f32
    xb = x.astype(bf16)

    # ---------------- fused QKV projection (one MXU matmul) ----------------
    wqkv = w_ref[0:E, off_qkv:off_qkv + 3 * E]       # (E, 3E) bf16
    bqkv = b_ref[0:1, 0:3 * E]                       # (1, 3E) f32
    qkv = jnp.dot(xb, wqkv, preferred_element_type=f32) + bqkv
    q = qkv[:, 0:E]
    k = qkv[:, E:2 * E]
    v = qkv[:, 2 * E:3 * E]

    hsel = hsel_ref[...]                             # (H, E) f32, layer-invariant

    # Per-head queries, zero-padded over the feature axis and stacked along
    # rows (row r = h*N + i) -> ONE matmul covers every head. f32 elementwise,
    # single bf16 cast at the MXU operand.
    qh = ((q * scale)[None, :, :] * hsel[:, None, :]).reshape(nhead * N, E)
    scores = jax.lax.dot_general(                    # (H*N, N) f32
        qh.astype(bf16), k.astype(bf16),
        dimension_numbers=(((1,), (1,)), ((), ())),
        preferred_element_type=f32)

    # Additive cross-batch mask (0 / -1e30), precomputed in the wrapper.
    # Scores are f32 here, so -1e30 is safe (no bf16 overflow).
    scores = scores + mask_ref[...]

    # Numerically stable softmax; denominator reciprocal goes to the EUP.
    scores = scores - jnp.max(scores, axis=-1, keepdims=True)
    p = jnp.exp(scores)
    p = p * pl.reciprocal(jnp.sum(p, axis=-1, keepdims=True), approx=True)

    ctx = jnp.dot(p.astype(bf16), v.astype(bf16),
                  preferred_element_type=f32)        # (H*N, E)
    # Keep, per feature column, only its own head's contribution.
    attn = jnp.sum(ctx.reshape(nhead, N, E) * hsel[:, None, :], axis=0)  # (N, E)

    wo = w_ref[0:E, off_wo:off_wo + E]
    bo = b_ref[1:2, 0:E]
    attn = jnp.dot(attn.astype(bf16), wo, preferred_element_type=f32) + bo

    # ---------------- residual + LayerNorm 1 -------------------------------
    y = x + attn
    mu = jnp.mean(y, axis=-1, keepdims=True)
    var = jnp.mean((y - mu) ** 2, axis=-1, keepdims=True)
    ln1g = b_ref[4:5, 0:E]
    ln1b = b_ref[5:6, 0:E]
    y = (y - mu) * jax.lax.rsqrt(var + eps) * ln1g + ln1b

    # ---------------- feed-forward (Linear -> ReLU -> Linear) --------------
    w1 = w_ref[0:E, off_w1:off_w1 + F]
    b1 = b_ref[2:3, 0:F]
    h1 = jnp.dot(y.astype(bf16), w1, preferred_element_type=f32) + b1
    h1 = jnp.maximum(h1, 0.0)
    w2 = w_ref[0:F, off_w2:off_w2 + E]
    b2 = b_ref[3:4, 0:E]
    ff = jnp.dot(h1.astype(bf16), w2, preferred_element_type=f32) + b2

    # ---------------- residual + LayerNorm 2 -------------------------------
    z = y + ff
    mu2 = jnp.mean(z, axis=-1, keepdims=True)
    var2 = jnp.mean((z - mu2) ** 2, axis=-1, keepdims=True)
    ln2g = b_ref[6:7, 0:E]
    ln2b = b_ref[7:8, 0:E]
    z = (z - mu2) * jax.lax.rsqrt(var2 + eps) * ln2g + ln2b

    # Skip the dead resident-scratch store on the final layer.
    @pl.when(layer < n_layers - 1)
    def _():
        h_ref[...] = z

    @pl.when(layer == n_layers - 1)
    def _():
        o_ref[...] = z.astype(o_ref.dtype)


# ----------------------------- wrapper ---------------------------------------
def transformer_encoder_stack(src_sbe, layer_params, *, nhead, eps=1e-5):
    """Equivalent of TransformerEncoderLayerStack.forward(src, None, None).

    src_sbe: (S, B, E) float32 — PyTorch (seq, batch, embed) convention.
    layer_params: list of per-layer parameter dicts (see init_layer_params).
    """
    S, B, E = src_sbe.shape
    num_layers = len(layer_params)
    F = layer_params[0]["w1"].shape[1]
    N = S * B
    assert E % nhead == 0
    hd = E // nhead

    # ---- pack per-layer params into 2 slabs (bf16 weights, f32 bias/LN) ----
    # Weight-slab column offsets are 128-lane aligned.
    off_qkv = 0
    off_wo = _round_up(3 * E, 128)
    off_w1 = off_wo + _round_up(E, 128)
    off_w2 = off_w1 + _round_up(F, 128)
    WC = off_w2 + _round_up(E, 128)
    WR = max(E, F)
    BC = _round_up(max(3 * E, F, E), 128)

    def pack(p):
        w = jnp.zeros((WR, WC), jnp.bfloat16)
        wqkv = jnp.concatenate([p["wq"], p["wk"], p["wv"]], axis=1).astype(jnp.bfloat16)
        w = w.at[0:E, off_qkv:off_qkv + 3 * E].set(wqkv)
        w = w.at[0:E, off_wo:off_wo + E].set(p["wo"].astype(jnp.bfloat16))
        w = w.at[0:E, off_w1:off_w1 + F].set(p["w1"].astype(jnp.bfloat16))
        w = w.at[0:F, off_w2:off_w2 + E].set(p["w2"].astype(jnp.bfloat16))
        b = jnp.zeros((8, BC), jnp.float32)
        bqkv = jnp.concatenate([p["bq"], p["bk"], p["bv"]], axis=1).astype(jnp.float32)
        b = b.at[0, 0:3 * E].set(bqkv[0])
        b = b.at[1, 0:E].set(p["bo"][0].astype(jnp.float32))
        b = b.at[2, 0:F].set(p["b1"][0].astype(jnp.float32))
        b = b.at[3, 0:E].set(p["b2"][0].astype(jnp.float32))
        b = b.at[4, 0:E].set(p["ln1g"][0].astype(jnp.float32))
        b = b.at[5, 0:E].set(p["ln1b"][0].astype(jnp.float32))
        b = b.at[6, 0:E].set(p["ln2g"][0].astype(jnp.float32))
        b = b.at[7, 0:E].set(p["ln2b"][0].astype(jnp.float32))
        return w, b

    packed = [pack(p) for p in layer_params]
    w_all = jnp.stack([w for w, _ in packed], axis=0)    # (L, WR, WC) bf16
    b_all = jnp.stack([b for _, b in packed], axis=0)    # (L, 8, BC) f32

    # ---- layer-invariant constants (hoisted out of the per-layer body) ----
    # Tokens are sequence-major (row = s*B + b).  Build the cross-batch mask
    # from the exact row -> batch-id map (no modular-arithmetic assumption).
    q_batch = (jnp.arange(nhead * N) % N) % B
    k_batch = jnp.arange(N) % B
    mask_add = jnp.where(q_batch[:, None] == k_batch[None, :],
                         0.0, -1e30).astype(jnp.float32)          # (H*N, N)
    head_sel = (jnp.arange(E)[None, :] // hd
                == jnp.arange(nhead)[:, None]).astype(jnp.float32)  # (H, E)

    # (S, B, E) -> (S*B, E): contiguous flatten, NO transpose / HBM shuffle.
    x = src_sbe.reshape(N, E)

    kernel = functools.partial(
        _stack_kernel, nhead=nhead, eps=eps, E=E, F=F,
        off_qkv=off_qkv, off_wo=off_wo, off_w1=off_w1, off_w2=off_w2)

    flops_per_layer = (2 * N * E * 3 * E            # fused QKV projection
                       + 2 * (nhead * N) * N * E    # scores
                       + 2 * (nhead * N) * N * E    # probs @ V
                       + 2 * N * E * E              # output projection
                       + 2 * N * E * F + 2 * N * F * E)  # FFN
    bytes_accessed = (2 * x.size * 4 + w_all.size * 2 + b_all.size * 4
                      + mask_add.size * 4 + head_sel.size * 4)
    cost = pl.CostEstimate(flops=num_layers * flops_per_layer,
                           transcendentals=num_layers * nhead * N * N,
                           bytes_accessed=bytes_accessed)

    out = pl.pallas_call(
        kernel,
        out_shape=jax.ShapeDtypeStruct((N, E), src_sbe.dtype),
        grid=(num_layers,),
        in_specs=[
            pl.BlockSpec((N, E), lambda l: (0, 0)),              # activations in
            pl.BlockSpec((nhead * N, N), lambda l: (0, 0)),      # additive mask
            pl.BlockSpec((nhead, E), lambda l: (0, 0)),          # head selector
            pl.BlockSpec((None, WR, WC), lambda l: (l, 0, 0)),   # weight slab
            pl.BlockSpec((None, 8, BC), lambda l: (l, 0, 0)),    # bias/LN slab
        ],
        out_specs=pl.BlockSpec((N, E), lambda l: (0, 0)),
        scratch_shapes=[pltpu.VMEM((N, E), jnp.float32)],
        compiler_params=pltpu.CompilerParams(
            dimension_semantics=("arbitrary",)),  # layer axis is sequential
        cost_estimate=cost,
    )(x, mask_add, head_sel, w_all, b_all)

    return out.reshape(S, B, E)


# ----------------------------- pure-JAX reference ---------------------------
def _bf16_dot(a, b):
    return jnp.dot(a.astype(jnp.bfloat16), b.astype(jnp.bfloat16),
                   preferred_element_type=jnp.float32)


def _ref_layer(x, p, nhead, eps=1e-5):      # x: (B, S, E) f32
    B, S, E = x.shape
    hd = E // nhead
    scale = 1.0 / float(hd) ** 0.5
    q = _bf16_dot(x, p["wq"]) + p["bq"]
    k = _bf16_dot(x, p["wk"]) + p["bk"]
    v = _bf16_dot(x, p["wv"]) + p["bv"]
    qh = (q * scale).reshape(B, S, nhead, hd).transpose(0, 2, 1, 3)
    kh = k.reshape(B, S, nhead, hd).transpose(0, 2, 1, 3)
    vh = v.reshape(B, S, nhead, hd).transpose(0, 2, 1, 3)
    s = jnp.einsum("bhqd,bhkd->bhqk", qh.astype(jnp.bfloat16),
                   kh.astype(jnp.bfloat16), preferred_element_type=jnp.float32)
    pr = jax.nn.softmax(s, axis=-1)
    a = jnp.einsum("bhqk,bhkd->bhqd", pr.astype(jnp.bfloat16),
                   vh.astype(jnp.bfloat16), preferred_element_type=jnp.float32)
    a = a.transpose(0, 2, 1, 3).reshape(B, S, E)
    a = _bf16_dot(a, p["wo"]) + p["bo"]
    y = x + a
    mu = y.mean(-1, keepdims=True)
    var = ((y - mu) ** 2).mean(-1, keepdims=True)
    y = (y - mu) * jax.lax.rsqrt(var + eps) * p["ln1g"] + p["ln1b"]
    f = jnp.maximum(_bf16_dot(y, p["w1"]) + p["b1"], 0.0)
    f = _bf16_dot(f, p["w2"]) + p["b2"]
    z = y + f
    mu2 = z.mean(-1, keepdims=True)
    var2 = ((z - mu2) ** 2).mean(-1, keepdims=True)
    return (z - mu2) * jax.lax.rsqrt(var2 + eps) * p["ln2g"] + p["ln2b"]


def _ref_stack(src_sbe, layer_params, nhead):
    x = jnp.transpose(src_sbe, (1, 0, 2))
    for p in layer_params:
        x = _ref_layer(x, p, nhead)
    return jnp.transpose(x, (1, 0, 2))


# ----------------------------- parameter init -------------------------------
def init_layer_params(key, E, F):
    ks = jax.random.split(key, 12)
    s = 0.05
    w = lambda k, shp: (s * jax.random.normal(k, shp, jnp.float32)).astype(jnp.bfloat16)
    b = lambda k, shp: s * jax.random.normal(k, shp, jnp.float32)
    return dict(
        wq=w(ks[0], (E, E)), bq=b(ks[1], (1, E)),      # in_proj_weight[:E].T
        wk=w(ks[2], (E, E)), bk=b(ks[3], (1, E)),
        wv=w(ks[4], (E, E)), bv=b(ks[5], (1, E)),
        wo=w(ks[6], (E, E)), bo=b(ks[7], (1, E)),      # out_proj.weight.T
        ln1g=jnp.ones((1, E), jnp.float32), ln1b=jnp.zeros((1, E), jnp.float32),
        w1=w(ks[8], (E, F)), b1=b(ks[9], (1, F)),      # linear1.weight.T
        w2=w(ks[10], (F, E)), b2=b(ks[11], (1, E)),    # linear2.weight.T
        ln2g=jnp.ones((1, E), jnp.float32), ln2b=jnp.zeros((1, E), jnp.float32),
    )


if __name__ == "__main__":
    S, B, E = 8, 2, 32          # (seq, batch, d_model) — PyTorch convention
    NHEAD, FF = 4, 64
    NUM_LAYERS = 2

    key = jax.random.PRNGKey(0)
    k_in, *k_layers = jax.random.split(key, 1 + NUM_LAYERS)

    src = jax.random.normal(k_in, (S, B, E), jnp.float32)
    layer_params = [init_layer_params(k, E, FF) for k in k_layers]

    out = transformer_encoder_stack(src, layer_params, nhead=NHEAD)
    out = jax.block_until_ready(out)

    ref = jax.block_until_ready(_ref_stack(src, layer_params, NHEAD))
    assert out.shape == (S, B, E)
    assert jnp.all(jnp.isfinite(out))
    max_err = float(jnp.max(jnp.abs(out - ref)))
    assert jnp.allclose(out, ref, rtol=2e-2, atol=2e-2), f"mismatch vs reference: {max_err}"

    print("KERNEL_OK")
</pallas_src>

<mosaic_0001>
module attributes {stable_mosaic.version = 11 : i64} {
  func.func @_stack_kernel(%arg0: i32, %arg1: memref<16x32xf32, #tpu.memory_space<vmem>>, %arg2: memref<64x16xf32, #tpu.memory_space<vmem>>, %arg3: memref<4x32xf32, #tpu.memory_space<vmem>>, %arg4: memref<1x64x512xbf16, #tpu.memory_space<vmem>>, %arg5: memref<1x8x128xf32, #tpu.memory_space<vmem>>, %arg6: memref<16x32xf32, #tpu.memory_space<vmem>>, %arg7: memref<16x32xf32, #tpu.memory_space<vmem>>) attributes {dimension_semantics = [#tpu.dimension_semantics<arbitrary>], iteration_bounds = array<i64: 2>, scalar_prefetch = 0 : i64, scratch_operands = 1 : i64, tpu.core_type = #tpu.core_type<tc>, window_params = [{pipeline_mode = #tpu.pipeline_mode<synchronous>, transform_indices = @transform_0, window_bounds = array<i64: 16, 32>}, {pipeline_mode = #tpu.pipeline_mode<synchronous>, transform_indices = @transform_1, window_bounds = array<i64: 64, 16>}, {pipeline_mode = #tpu.pipeline_mode<synchronous>, transform_indices = @transform_2, window_bounds = array<i64: 4, 32>}, {transform_indices = @transform_3, window_bounds = array<i64: 1, 64, 512>}, {transform_indices = @transform_4, window_bounds = array<i64: 1, 8, 128>}, {pipeline_mode = #tpu.pipeline_mode<synchronous>, transform_indices = @transform_5, window_bounds = array<i64: 16, 32>}]} {
    %c0_i32 = arith.constant 0 : i32
    %0 = arith.cmpi eq, %arg0, %c0_i32 : i32
    %1 = arith.extui %0 : i1 to i32
    %c0_i32_0 = arith.constant 0 : i32
    %2 = arith.cmpi ne, %1, %c0_i32_0 : i32
    scf.if %2 {
      %c0_55 = arith.constant 0 : index
      %c0_56 = arith.constant 0 : index
      %133 = vector.load %arg1[%c0_55, %c0_56] : memref<16x32xf32, #tpu.memory_space<vmem>>, vector<16x32xf32>
      %c0_57 = arith.constant 0 : index
      %c0_58 = arith.constant 0 : index
      %134 = vector.load %arg7[%c0_57, %c0_58] : memref<16x32xf32, #tpu.memory_space<vmem>>, vector<16x32xf32>
      tpu.vector_store %arg7[%c0_57, %c0_58], %133 {strides = array<i32>} : memref<16x32xf32, #tpu.memory_space<vmem>>, vector<16x32xf32>,
    } else {
    }
    %c0 = arith.constant 0 : index
    %c0_1 = arith.constant 0 : index
    %3 = vector.load %arg7[%c0, %c0_1] : memref<16x32xf32, #tpu.memory_space<vmem>>, vector<16x32xf32>
    %4 = arith.truncf %3 : vector<16x32xf32> to vector<16x32xbf16>
    %c0_2 = arith.constant 0 : index
    %c0_3 = arith.constant 0 : index
    %c0_4 = arith.constant 0 : index
    %5 = vector.load %arg4[%c0_2, %c0_3, %c0_4] : memref<1x64x512xbf16, #tpu.memory_space<vmem>>, vector<1x32x96xbf16>
    %6 = vector.shape_cast %5 : vector<1x32x96xbf16> to vector<32x96xbf16>
    %c0_5 = arith.constant 0 : index
    %c0_6 = arith.constant 0 : index
    %c0_7 = arith.constant 0 : index
    %7 = vector.load %arg5[%c0_5, %c0_6, %c0_7] : memref<1x8x128xf32, #tpu.memory_space<vmem>>, vector<1x1x96xf32>
    %8 = vector.shape_cast %7 : vector<1x1x96xf32> to vector<1x96xf32>
    %cst = arith.constant dense<0.000000e+00> : vector<16x96xf32>
    %9 = tpu.matmul %4, %6, %cst {dimension_numbers = #tpu.dot_dimension_numbers<[1], [0], [0], [1], [0, 0, 1, 1], [], []>} : vector<16x32xbf16>, vector<32x96xbf16>, vector<16x96xf32> -> vector<16x96xf32>
    %10 = vector.broadcast %8 : vector<1x96xf32> to vector<16x96xf32>
    %11 = arith.addf %9, %10 : vector<16x96xf32>
    %12 = vector.extract_strided_slice %11 {offsets = [0, 0], sizes = [16, 32], strides = [1, 1]} : vector<16x96xf32> to vector<16x32xf32>
    %13 = vector.extract_strided_slice %11 {offsets = [0, 32], sizes = [16, 32], strides = [1, 1]} : vector<16x96xf32> to vector<16x32xf32>
    %14 = vector.extract_strided_slice %11 {offsets = [0, 64], sizes = [16, 32], strides = [1, 1]} : vector<16x96xf32> to vector<16x32xf32>
    %c0_8 = arith.constant 0 : index
    %c0_9 = arith.constant 0 : index
    %15 = vector.load %arg3[%c0_8, %c0_9] : memref<4x32xf32, #tpu.memory_space<vmem>>, vector<4x32xf32>
    %cst_10 = arith.constant 0.353553385 : f32
    %16 = vector.broadcast %cst_10 : f32 to vector<16x32xf32>
    %17 = arith.mulf %12, %16 : vector<16x32xf32>
    %18 = vector.shape_cast %17 : vector<16x32xf32> to vector<1x16x32xf32>
    %19 = vector.shape_cast %15 : vector<4x32xf32> to vector<4x1x32xf32>
    %20 = vector.broadcast %18 : vector<1x16x32xf32> to vector<4x16x32xf32>
    %21 = vector.broadcast %19 : vector<4x1x32xf32> to vector<4x16x32xf32>
    %22 = arith.mulf %20, %21 : vector<4x16x32xf32>
    %23 = vector.shape_cast %22 : vector<4x16x32xf32> to vector<64x32xf32>
    %24 = arith.truncf %23 : vector<64x32xf32> to vector<64x32xbf16>
    %25 = arith.truncf %13 : vector<16x32xf32> to vector<16x32xbf16>
    %cst_11 = arith.constant dense<0.000000e+00> : vector<64x16xf32>
    %26 = tpu.matmul %24, %25, %cst_11 {dimension_numbers = #tpu.dot_dimension_numbers<[1], [1], [0], [0], [0, 0, 1, 0], [], []>} : vector<64x32xbf16>, vector<16x32xbf16>, vector<64x16xf32> -> vector<64x16xf32>
    %c0_12 = arith.constant 0 : index
    %c0_13 = arith.constant 0 : index
    %27 = vector.load %arg2[%c0_12, %c0_13] : memref<64x16xf32, #tpu.memory_space<vmem>>, vector<64x16xf32>
    %28 = arith.addf %26, %27 : vector<64x16xf32>
    %cst_14 = arith.constant dense<0xFF800000> : vector<64xf32>
    %29 = vector.multi_reduction <maximumf>, %28, %cst_14 [1] : vector<64x16xf32> to vector<64xf32>
    %30 = vector.shape_cast %29 : vector<64xf32> to vector<64x1xf32>
    %31 = vector.broadcast %30 : vector<64x1xf32> to vector<64x16xf32>
    %32 = arith.subf %28, %31 : vector<64x16xf32>
    %33 = math.exp %32 : vector<64x16xf32>
    %cst_15 = arith.constant dense<0.000000e+00> : vector<64xf32>
    %34 = vector.multi_reduction <add>, %33, %cst_15 [1] : vector<64x16xf32> to vector<64xf32>
    %35 = vector.shape_cast %34 : vector<64xf32> to vector<64x1xf32>
    %36 = tpu.reciprocal %35 {approx = true} : vector<64x1xf32> -> vector<64x1xf32>
    %37 = vector.broadcast %36 : vector<64x1xf32> to vector<64x16xf32>
    %38 = arith.mulf %33, %37 : vector<64x16xf32>
    %39 = arith.truncf %38 : vector<64x16xf32> to vector<64x16xbf16>
    %40 = arith.truncf %14 : vector<16x32xf32> to vector<16x32xbf16>
    %cst_16 = arith.constant dense<0.000000e+00> : vector<64x32xf32>
    %41 = tpu.matmul %39, %40, %cst_16 {dimension_numbers = #tpu.dot_dimension_numbers<[1], [0], [0], [1], [0, 0, 1, 1], [], []>} : vector<64x16xbf16>, vector<16x32xbf16>, vector<64x32xf32> -> vector<64x32xf32>
    %42 = vector.shape_cast %41 : vector<64x32xf32> to vector<4x16x32xf32>
    %43 = vector.shape_cast %15 : vector<4x32xf32> to vector<4x1x32xf32>
    %44 = vector.broadcast %43 : vector<4x1x32xf32> to vector<4x16x32xf32>
    %45 = arith.mulf %42, %44 : vector<4x16x32xf32>
    %cst_17 = arith.constant dense<0.000000e+00> : vector<16x32xf32>
    %46 = vector.multi_reduction <add>, %45, %cst_17 [0] : vector<4x16x32xf32> to vector<16x32xf32>
    %c0_18 = arith.constant 0 : index
    %c0_19 = arith.constant 0 : index
    %c128 = arith.constant 128 : index
    %47 = vector.load %arg4[%c0_18, %c0_19, %c128] : memref<1x64x512xbf16, #tpu.memory_space<vmem>>, vector<1x32x32xbf16>
    %48 = vector.shape_cast %47 : vector<1x32x32xbf16> to vector<32x32xbf16>
    %c0_20 = arith.constant 0 : index
    %c1 = arith.constant 1 : index
    %c0_21 = arith.constant 0 : index
    %49 = vector.load %arg5[%c0_20, %c1, %c0_21] : memref<1x8x128xf32, #tpu.memory_space<vmem>>, vector<1x1x32xf32>
    %50 = vector.shape_cast %49 : vector<1x1x32xf32> to vector<1x32xf32>
    %51 = arith.truncf %46 : vector<16x32xf32> to vector<16x32xbf16>
    %cst_22 = arith.constant dense<0.000000e+00> : vector<16x32xf32>
    %52 = tpu.matmul %51, %48, %cst_22 {dimension_numbers = #tpu.dot_dimension_numbers<[1], [0], [0], [1], [0, 0, 1, 1], [], []>} : vector<16x32xbf16>, vector<32x32xbf16>, vector<16x32xf32> -> vector<16x32xf32>
    %53 = vector.broadcast %50 : vector<1x32xf32> to vector<16x32xf32>
    %54 = arith.addf %52, %53 : vector<16x32xf32>
    %55 = arith.addf %3, %54 : vector<16x32xf32>
    %cst_23 = arith.constant dense<0.000000e+00> : vector<16xf32>
    %56 = vector.multi_reduction <add>, %55, %cst_23 [1] : vector<16x32xf32> to vector<16xf32>
    %57 = vector.shape_cast %56 : vector<16xf32> to vector<16x1xf32>
    %cst_24 = arith.constant 3.200000e+01 : f32
    %58 = vector.broadcast %cst_24 : f32 to vector<16x1xf32>
    %59 = arith.divf %57, %58 : vector<16x1xf32>
    %60 = vector.broadcast %59 : vector<16x1xf32> to vector<16x32xf32>
    %61 = arith.subf %55, %60 : vector<16x32xf32>
    %62 = arith.mulf %61, %61 : vector<16x32xf32>
    %cst_25 = arith.constant dense<0.000000e+00> : vector<16xf32>
    %63 = vector.multi_reduction <add>, %62, %cst_25 [1] : vector<16x32xf32> to vector<16xf32>
    %64 = vector.shape_cast %63 : vector<16xf32> to vector<16x1xf32>
    %cst_26 = arith.constant 3.200000e+01 : f32
    %65 = vector.broadcast %cst_26 : f32 to vector<16x1xf32>
    %66 = arith.divf %64, %65 : vector<16x1xf32>
    %c0_27 = arith.constant 0 : index
    %c4 = arith.constant 4 : index
    %c0_28 = arith.constant 0 : index
    %67 = vector.load %arg5[%c0_27, %c4, %c0_28] : memref<1x8x128xf32, #tpu.memory_space<vmem>>, vector<1x1x32xf32>
    %68 = vector.shape_cast %67 : vector<1x1x32xf32> to vector<1x32xf32>
    %c0_29 = arith.constant 0 : index
    %c5 = arith.constant 5 : index
    %c0_30 = arith.constant 0 : index
    %69 = vector.load %arg5[%c0_29, %c5, %c0_30] : memref<1x8x128xf32, #tpu.memory_space<vmem>>, vector<1x1x32xf32>
    %70 = vector.shape_cast %69 : vector<1x1x32xf32> to vector<1x32xf32>
    %71 = vector.broadcast %59 : vector<16x1xf32> to vector<16x32xf32>
    %72 = arith.subf %55, %71 : vector<16x32xf32>
    %cst_31 = arith.constant 9.99999974E-6 : f32
    %73 = vector.broadcast %cst_31 : f32 to vector<16x1xf32>
    %74 = arith.addf %66, %73 : vector<16x1xf32>
    %75 = math.rsqrt %74 : vector<16x1xf32>
    %76 = vector.broadcast %75 : vector<16x1xf32> to vector<16x32xf32>
    %77 = arith.mulf %72, %76 : vector<16x32xf32>
    %78 = vector.broadcast %68 : vector<1x32xf32> to vector<16x32xf32>
    %79 = arith.mulf %77, %78 : vector<16x32xf32>
    %80 = vector.broadcast %70 : vector<1x32xf32> to vector<16x32xf32>
    %81 = arith.addf %79, %80 : vector<16x32xf32>
    %c0_32 = arith.constant 0 : index
    %c0_33 = arith.constant 0 : index
    %c256 = arith.constant 256 : index
    %82 = vector.load %arg4[%c0_32, %c0_33, %c256] : memref<1x64x512xbf16, #tpu.memory_space<vmem>>, vector<1x32x64xbf16>
    %83 = vector.shape_cast %82 : vector<1x32x64xbf16> to vector<32x64xbf16>
    %c0_34 = arith.constant 0 : index
    %c2 = arith.constant 2 : index
    %c0_35 = arith.constant 0 : index
    %84 = vector.load %arg5[%c0_34, %c2, %c0_35] : memref<1x8x128xf32, #tpu.memory_space<vmem>>, vector<1x1x64xf32>
    %85 = vector.shape_cast %84 : vector<1x1x64xf32> to vector<1x64xf32>
    %86 = arith.truncf %81 : vector<16x32xf32> to vector<16x32xbf16>
    %cst_36 = arith.constant dense<0.000000e+00> : vector<16x64xf32>
    %87 = tpu.matmul %86, %83, %cst_36 {dimension_numbers = #tpu.dot_dimension_numbers<[1], [0], [0], [1], [0, 0, 1, 1], [], []>} : vector<16x32xbf16>, vector<32x64xbf16>, vector<16x64xf32> -> vector<16x64xf32>
    %88 = vector.broadcast %85 : vector<1x64xf32> to vector<16x64xf32>
    %89 = arith.addf %87, %88 : vector<16x64xf32>
    %cst_37 = arith.constant 0.000000e+00 : f32
    %90 = vector.broadcast %cst_37 : f32 to vector<16x64xf32>
    %91 = arith.maximumf %89, %90 : vector<16x64xf32>
    %c0_38 = arith.constant 0 : index
    %c0_39 = arith.constant 0 : index
    %c384 = arith.constant 384 : index
    %92 = vector.load %arg4[%c0_38, %c0_39, %c384] : memref<1x64x512xbf16, #tpu.memory_space<vmem>>, vector<1x64x32xbf16>
    %93 = vector.shape_cast %92 : vector<1x64x32xbf16> to vector<64x32xbf16>
    %c0_40 = arith.constant 0 : index
    %c3 = arith.constant 3 : index
    %c0_41 = arith.constant 0 : index
    %94 = vector.load %arg5[%c0_40, %c3, %c0_41] : memref<1x8x128xf32, #tpu.memory_space<vmem>>, vector<1x1x32xf32>
    %95 = vector.shape_cast %94 : vector<1x1x32xf32> to vector<1x32xf32>
    %96 = arith.truncf %91 : vector<16x64xf32> to vector<16x64xbf16>
    %cst_42 = arith.constant dense<0.000000e+00> : vector<16x32xf32>
    %97 = tpu.matmul %96, %93, %cst_42 {dimension_numbers = #tpu.dot_dimension_numbers<[1], [0], [0], [1], [0, 0, 1, 1], [], []>} : vector<16x64xbf16>, vector<64x32xbf16>, vector<16x32xf32> -> vector<16x32xf32>
    %98 = vector.broadcast %95 : vector<1x32xf32> to vector<16x32xf32>
    %99 = arith.addf %97, %98 : vector<16x32xf32>
    %100 = arith.addf %81, %99 : vector<16x32xf32>
    %cst_43 = arith.constant dense<0.000000e+00> : vector<16xf32>
    %101 = vector.multi_reduction <add>, %100, %cst_43 [1] : vector<16x32xf32> to vector<16xf32>
    %102 = vector.shape_cast %101 : vector<16xf32> to vector<16x1xf32>
    %cst_44 = arith.constant 3.200000e+01 : f32
    %103 = vector.broadcast %cst_44 : f32 to vector<16x1xf32>
    %104 = arith.divf %102, %103 : vector<16x1xf32>
    %105 = vector.broadcast %104 : vector<16x1xf32> to vector<16x32xf32>
    %106 = arith.subf %100, %105 : vector<16x32xf32>
    %107 = arith.mulf %106, %106 : vector<16x32xf32>
    %cst_45 = arith.constant dense<0.000000e+00> : vector<16xf32>
    %108 = vector.multi_reduction <add>, %107, %cst_45 [1] : vector<16x32xf32> to vector<16xf32>
    %109 = vector.shape_cast %108 : vector<16xf32> to vector<16x1xf32>
    %cst_46 = arith.constant 3.200000e+01 : f32
    %110 = vector.broadcast %cst_46 : f32 to vector<16x1xf32>
    %111 = arith.divf %109, %110 : vector<16x1xf32>
    %c0_47 = arith.constant 0 : index
    %c6 = arith.constant 6 : index
    %c0_48 = arith.constant 0 : index
    %112 = vector.load %arg5[%c0_47, %c6, %c0_48] : memref<1x8x128xf32, #tpu.memory_space<vmem>>, vector<1x1x32xf32>
    %113 = vector.shape_cast %112 : vector<1x1x32xf32> to vector<1x32xf32>
    %c0_49 = arith.constant 0 : index
    %c7 = arith.constant 7 : index
    %c0_50 = arith.constant 0 : index
    %114 = vector.load %arg5[%c0_49, %c7, %c0_50] : memref<1x8x128xf32, #tpu.memory_space<vmem>>, vector<1x1x32xf32>
    %115 = vector.shape_cast %114 : vector<1x1x32xf32> to vector<1x32xf32>
    %116 = vector.broadcast %104 : vector<16x1xf32> to vector<16x32xf32>
    %117 = arith.subf %100, %116 : vector<16x32xf32>
    %cst_51 = arith.constant 9.99999974E-6 : f32
    %118 = vector.broadcast %cst_51 : f32 to vector<16x1xf32>
    %119 = arith.addf %111, %118 : vector<16x1xf32>
    %120 = math.rsqrt %119 : vector<16x1xf32>
    %121 = vector.broadcast %120 : vector<16x1xf32> to vector<16x32xf32>
    %122 = arith.mulf %117, %121 : vector<16x32xf32>
    %123 = vector.broadcast %113 : vector<1x32xf32> to vector<16x32xf32>
    %124 = arith.mulf %122, %123 : vector<16x32xf32>
    %125 = vector.broadcast %115 : vector<1x32xf32> to vector<16x32xf32>
    %126 = arith.addf %124, %125 : vector<16x32xf32>
    %c1_i32 = arith.constant 1 : i32
    %127 = arith.cmpi slt, %arg0, %c1_i32 : i32
    %128 = arith.extui %127 : i1 to i32
    %c0_i32_52 = arith.constant 0 : i32
    %129 = arith.cmpi ne, %128, %c0_i32_52 : i32
    scf.if %129 {
      %c0_55 = arith.constant 0 : index
      %c0_56 = arith.constant 0 : index
      %133 = vector.load %arg7[%c0_55, %c0_56] : memref<16x32xf32, #tpu.memory_space<vmem>>, vector<16x32xf32>
      tpu.vector_store %arg7[%c0_55, %c0_56], %126 {strides = array<i32>} : memref<16x32xf32, #tpu.memory_space<vmem>>, vector<16x32xf32>,
    } else {
    }
    %c1_i32_53 = arith.constant 1 : i32
    %130 = arith.cmpi eq, %arg0, %c1_i32_53 : i32
    %131 = arith.extui %130 : i1 to i32
    %c0_i32_54 = arith.constant 0 : i32
    %132 = arith.cmpi ne, %131, %c0_i32_54 : i32
    scf.if %132 {
      %c0_55 = arith.constant 0 : index
      %c0_56 = arith.constant 0 : index
      %133 = vector.load %arg6[%c0_55, %c0_56] : memref<16x32xf32, #tpu.memory_space<vmem>>, vector<16x32xf32>
      tpu.vector_store %arg6[%c0_55, %c0_56], %126 {strides = array<i32>} : memref<16x32xf32, #tpu.memory_space<vmem>>, vector<16x32xf32>,
    } else {
    }
    return
  }
  func.func @transform_0(%arg0: i32) -> (i32, i32) {
    %c0_i32 = arith.constant 0 : i32
    %c0_i32_0 = arith.constant 0 : i32
    %c0_i32_1 = arith.constant 0 : i32
    return %c0_i32, %c0_i32_0 : i32, i32
  }
  func.func @transform_1(%arg0: i32) -> (i32, i32) {
    %c0_i32 = arith.constant 0 : i32
    %c0_i32_0 = arith.constant 0 : i32
    %c0_i32_1 = arith.constant 0 : i32
    return %c0_i32, %c0_i32_0 : i32, i32
  }
  func.func @transform_2(%arg0: i32) -> (i32, i32) {
    %c0_i32 = arith.constant 0 : i32
    %c0_i32_0 = arith.constant 0 : i32
    %c0_i32_1 = arith.constant 0 : i32
    return %c0_i32, %c0_i32_0 : i32, i32
  }
  func.func @transform_3(%arg0: i32) -> (i32, i32, i32) {
    %c0_i32 = arith.constant 0 : i32
    %c0_i32_0 = arith.constant 0 : i32
    %c0_i32_1 = arith.constant 0 : i32
    return %arg0, %c0_i32, %c0_i32_0 : i32, i32, i32
  }
  func.func @transform_4(%arg0: i32) -> (i32, i32, i32) {
    %c0_i32 = arith.constant 0 : i32
    %c0_i32_0 = arith.constant 0 : i32
    %c0_i32_1 = arith.constant 0 : i32
    return %arg0, %c0_i32, %c0_i32_0 : i32, i32, i32
  }
  func.func @transform_5(%arg0: i32) -> (i32, i32) {
    %c0_i32 = arith.constant 0 : i32
    %c0_i32_0 = arith.constant 0 : i32
    %c0_i32_1 = arith.constant 0 : i32
    return %c0_i32, %c0_i32_0 : i32, i32
  }
}

</mosaic_0001>

<llo_original>
// kernel: tpu_custom_call.1
$region0: #{tpu_custom_call.1}
  #allocation0 [shape = 'u32[]', space=smem, size = 0x4, offset = 0x4, fixed_abs, tag = 'smem constant byte address 0x4 - core index']
  #allocation1 [shape = 'u32[144,128]{1,0:T(1,128)}', space=vmem, size = 0x12000, scoped, tag = 'internal scratch']
  #allocation2 [shape = 'f32[16,32]{1,0:T(8,128)}', space=vmem, size = 0x2000, scoped, tag = 'scratch operand']
  %s0 = inlined_call_operand.vmem [shape: f32[16,32], index: 0, kind: input, shape index: {}]
  %s1 = inlined_call_operand.vmem [shape: f32[64,16], index: 1, kind: input, shape index: {}]
  %s2 = inlined_call_operand.vmem [shape: f32[4,32], index: 2, kind: input, shape index: {}]
  %s3 = inlined_call_operand.hbm [shape: bf16[2,64,512], index: 3, kind: input, shape index: {}]
  %s4 = inlined_call_operand.vmem [shape: f32[2,8,128], index: 4, kind: input, shape index: {}]
  %s5 = inlined_call_operand.hbm [shape: f32[16,32], index: 5, kind: output, shape index: {}]
  %s6 = sld [smem:[#allocation0]]
  $region69: #{tpu_custom_call.1} parent=0
    _
  %s8 = ssub.s32 1, %s6
  %s9 = scalar_select 0, %s8, %s6
  $region1: #{tpu_custom_call.1} parent=0
    #allocation3 [shape = 'u8[131072]{0}', space=vmem, size = 0x20000, scoped, tag = 'input window, operand 3']
    #allocation4 [shape = 's32[2]{0}', space=sflag, size = 0x8, scoped, tag = 'scoped memory for tpu_custom_call.1']
    #allocation5 [shape = 's32[2]{0}', space=sflag, size = 0x8, scoped, tag = 'scoped memory for tpu_custom_call.1']
    #allocation6 [shape = 'u8[8192]{0}', space=vmem, size = 0x2000, scoped, tag = 'output window, operand 0, single buffered']
    %10 = vsyncpa [#allocation4], 0
    %s11 = scalar_lea.sflag [#allocation4], 1
    %12 = vsyncpa %s11, 0
    %13 = vsyncpa [#allocation5], 0
    loop: start=0, step=1, limit=4
    $region2: #{tpu_custom_call.1} parent=1 // loop_pre_header
      _
    $region3: #{tpu_custom_call.1} parent=1 // loop_header
      %s15 = sphi 0, %s19
      %p16 = scmp.ge.s32.totalorder %s15, 4
      %s23 = sphi 0, %s23
      %s25 = sphi 0, %s23
      %s26 = sphi 0, %s25
      %s40 = sphi 0, %s26
      %s44 = sphi 0, %s44
      %s46 = sphi 0, %s44
      %s47 = sphi 0, %s46
      %s61 = sphi 0, %s47
      %s65 = sphi 0, %s65
      %s67 = sphi 0, %s65
      %s68 = sphi 0, %s67
      %s82 = sphi 0, %s68
      %s88 = sphi 0, %s90
      %s91 = sphi 0, %s88
      %s92 = sphi 0, %s91
      %s108 = sphi 0, %s92
      %s114 = sphi 0, %s116
      %s117 = sphi 0, %s114
      %s118 = sphi 0, %s117
      %s134 = sphi 0, %s118
      %s138 = sphi 0, %s138
      %s140 = sphi 0, %s138
      %s141 = sphi 0, %s140
      %s155 = sphi 0, %s141
    $region4: #{tpu_custom_call.1} parent=1 // loop_header_branch
      %18 = sbr.rel (%p16) target = $region8
    $region5: #{tpu_custom_call.1} parent=1 // loop_body
      %s20 = ssub.s32 %s15, 1
      %s21 = ssub.s32 %s15, 2
      %s22 = sadd.s32 %s15, 1
      %s24 = sadd.s32 %s23, 1
      %p27 = scmp.eq.s32.totalorder %s15, 1
      %p28 = scmp.ne.s32.totalorder %s23, %s25
      %p29 = scmp.eq.s32.totalorder %s15, 0
      %p30 = por %p28, %p29
      %p31 = scmp.ne.s32.totalorder %s23, %s25
      %p32 = scmp.eq.s32.totalorder %s20, 1
      %p33 = por %p31, %p32
      %p34 = scmp.ne.s32.totalorder %s25, %s26
      %p35 = scmp.eq.s32.totalorder %s20, 0
      %p36 = por %p34, %p35
      %p37 = scmp.ne.s32.totalorder %s25, %s26
      %p38 = scmp.eq.s32.totalorder %s21, 1
      %p39 = por %p37, %p38
      %p41 = scmp.ne.s32.totalorder %s26, %s40
      %p42 = scmp.eq.s32.totalorder %s21, 0
      %p43 = por %p41, %p42
      %s45 = sadd.s32 %s44, 1
      %p48 = scmp.eq.s32.totalorder %s15, 1
      %p49 = scmp.ne.s32.totalorder %s44, %s46
      %p50 = scmp.eq.s32.totalorder %s15, 0
      %p51 = por %p49, %p50
      %p52 = scmp.ne.s32.totalorder %s44, %s46
      %p53 = scmp.eq.s32.totalorder %s20, 1
      %p54 = por %p52, %p53
      %p55 = scmp.ne.s32.totalorder %s46, %s47
      %p56 = scmp.eq.s32.totalorder %s20, 0
      %p57 = por %p55, %p56
      %p58 = scmp.ne.s32.totalorder %s46, %s47
      %p59 = scmp.eq.s32.totalorder %s21, 1
      %p60 = por %p58, %p59
      %p62 = scmp.ne.s32.totalorder %s47, %s61
      %p63 = scmp.eq.s32.totalorder %s21, 0
      %p64 = por %p62, %p63
      %s66 = sadd.s32 %s65, 1
      %p69 = scmp.eq.s32.totalorder %s15, 1
      %p70 = scmp.ne.s32.totalorder %s65, %s67
      %p71 = scmp.eq.s32.totalorder %s15, 0
      %p72 = por %p70, %p71
      %p73 = scmp.ne.s32.totalorder %s65, %s67
      %p74 = scmp.eq.s32.totalorder %s20, 1
      %p75 = por %p73, %p74
      %p76 = scmp.ne.s32.totalorder %s67, %s68
      %p77 = scmp.eq.s32.totalorder %s20, 0
      %p78 = por %p76, %p77
      %p79 = scmp.ne.s32.totalorder %s67, %s68
      %p80 = scmp.eq.s32.totalorder %s21, 1
      %p81 = por %p79, %p80
      %p83 = scmp.ne.s32.totalorder %s68, %s82
      %p84 = scmp.eq.s32.totalorder %s21, 0
      %p85 = por %p83, %p84
      %s86 = ssub.s32 %s15, %s22
      %p87 = scmp.eq.s32.totalorder %s86, 0
      %s89 = sadd.s32 %s88, 1
      %s90 = scalar_select %p87, %s88, %s89
      %p93 = pneg %p87
      %p94 = scmp.eq.s32.totalorder %s15, 1
      %p95 = por %p93, %p94
      %p96 = scmp.ne.s32.totalorder %s88, %s91
      %p97 = scmp.eq.s32.totalorder %s15, 0
      %p98 = por %p96, %p97
      %p99 = scmp.ne.s32.totalorder %s88, %s91
      %p100 = scmp.eq.s32.totalorder %s20, 1
      %p101 = por %p99, %p100
      %p102 = scmp.ne.s32.totalorder %s91, %s92
      %p103 = scmp.eq.s32.totalorder %s20, 0
      %p104 = por %p102, %p103
      %p105 = scmp.ne.s32.totalorder %s91, %s92
      %p106 = scmp.eq.s32.totalorder %s21, 1
      %p107 = por %p105, %p106
      %p109 = scmp.ne.s32.totalorder %s92, %s108
      %p110 = scmp.eq.s32.totalorder %s21, 0
      %p111 = por %p109, %p110
      %s112 = ssub.s32 %s15, %s22
      %p113 = scmp.eq.s32.totalorder %s112, 0
      %s115 = sadd.s32 %s114, 1
      %s116 = scalar_select %p113, %s114, %s115
      %p119 = pneg %p113
      %p120 = scmp.eq.s32.totalorder %s15, 1
      %p121 = por %p119, %p120
      %p122 = scmp.ne.s32.totalorder %s114, %s117
      %p123 = scmp.eq.s32.totalorder %s15, 0
      %p124 = por %p122, %p123
      %p125 = scmp.ne.s32.totalorder %s114, %s117
      %p126 = scmp.eq.s32.totalorder %s20, 1
      %p127 = por %p125, %p126
      %p128 = scmp.ne.s32.totalorder %s117, %s118
      %p129 = scmp.eq.s32.totalorder %s20, 0
      %p130 = por %p128, %p129
      %p131 = scmp.ne.s32.totalorder %s117, %s118
      %p132 = scmp.eq.s32.totalorder %s21, 1
      %p133 = por %p131, %p132
      %p135 = scmp.ne.s32.totalorder %s118, %s134
      %p136 = scmp.eq.s32.totalorder %s21, 0
      %p137 = por %p135, %p136
      %s139 = sadd.s32 %s138, 1
      %p142 = scmp.eq.s32.totalorder %s15, 1
      %p143 = scmp.ne.s32.totalorder %s138, %s140
      %p144 = scmp.eq.s32.totalorder %s15, 0
      %p145 = por %p143, %p144
      %p146 = scmp.ne.s32.totalorder %s138, %s140
      %p147 = scmp.eq.s32.totalorder %s20, 1
      %p148 = por %p146, %p147
      %p149 = scmp.ne.s32.totalorder %s140, %s141
      %p150 = scmp.eq.s32.totalorder %s20, 0
      %p151 = por %p149, %p150
      %p152 = scmp.ne.s32.totalorder %s140, %s141
      %p153 = scmp.eq.s32.totalorder %s21, 1
      %p154 = por %p152, %p153
      %p156 = scmp.ne.s32.totalorder %s141, %s155
      %p157 = scmp.eq.s32.totalorder %s21, 0
      %p158 = por %p156, %p157
      %p159 = scmp.le.s32.totalorder 1, %s15
      %p160 = scmp.lt.s32.totalorder %s15, 3
      %p161 = pnand %p159, %p160
      %p162 = pneg %p161
      // Predicated region
      $region9: #{tpu_custom_call.1} parent=5 // pred_check
        _
      $region10: #{tpu_custom_call.1} parent=5 // pred_check_branch
        %164 = sbr.rel (%p161) target = $region12
      $region11: #{tpu_custom_call.1} parent=5 // pred_region
        %s165 = ssub.s32 %s15, 1
        // Predicated region
        $region13: #{tpu_custom_call.1} parent=11 // pred_check
          %p166 = pneg %p36
        $region14: #{tpu_custom_call.1} parent=11 // pred_check_branch
          %168 = sbr.rel (%p166) target = $region16
        $region15: #{tpu_custom_call.1} parent=11 // pred_region
          _
        $region16: #{tpu_custom_call.1} parent=11 // pred_fallthru
          _
        // Predicated region
        $region17: #{tpu_custom_call.1} parent=11 // pred_check
          %p169 = pneg %p57
        $region18: #{tpu_custom_call.1} parent=11 // pred_check_branch
          %171 = sbr.rel (%p169) target = $region20
        $region19: #{tpu_custom_call.1} parent=11 // pred_region
          _
        $region20: #{tpu_custom_call.1} parent=11 // pred_fallthru
          _
        // Predicated region
        $region21: #{tpu_custom_call.1} parent=11 // pred_check
          %p172 = pneg %p78
        $region22: #{tpu_custom_call.1} parent=11 // pred_check_branch
          %174 = sbr.rel (%p172) target = $region24
        $region23: #{tpu_custom_call.1} parent=11 // pred_region
          _
        $region24: #{tpu_custom_call.1} parent=11 // pred_fallthru
          _
      $region12: #{tpu_custom_call.1} parent=5 // pred_fallthru
        _
      %p175 = scmp.lt.s32.totalorder %s15, 2
      // Predicated region
      $region25: #{tpu_custom_call.1} parent=5 // pred_check
        %p176 = pneg %p175
      $region26: #{tpu_custom_call.1} parent=5 // pred_check_branch
        %178 = sbr.rel (%p176) target = $region28
      $region27: #{tpu_custom_call.1} parent=5 // pred_region
        // Predicated region
        $region29: #{tpu_custom_call.1} parent=27 // pred_check
          %p179 = pneg %p98
        $region30: #{tpu_custom_call.1} parent=27 // pred_check_branch
          %181 = sbr.rel (%p179) target = $region32
        $region31: #{tpu_custom_call.1} parent=27 // pred_region
          %s182 = sand.u32 %s88, 1
          %s183 = scalar_lea.sflag [#allocation4], %s182
          %s184 = sand.u32 %s88, 1
          %s185 = smul.addr %s184, 128
          %s186 = scalar_lea.vmem [#allocation3], %s185
          %s188 = ssub.s32 2048, 2048
          %189 = vsyncadd %s183, %s188
          %s190 = smul.addr %s15, 32
          %s191 = smul.addr %s190, 64
          %s192 = scalar_lea.hbm %s3, %s191
          %s193 = sshll.u32 %s186, 4
          %s194 = int_to_ptr.vmem [resolvable:$true] %s193
          %199 = dma.hbm_to_vmem [thread:$0]  %s192, 2048, %s194, %s183, 256, 256, 16
        $region32: #{tpu_custom_call.1} parent=27 // pred_fallthru
          _
        // Predicated region
        $region33: #{tpu_custom_call.1} parent=27 // pred_check
          %p200 = pneg %p124
        $region34: #{tpu_custom_call.1} parent=27 // pred_check_branch
          %202 = sbr.rel (%p200) target = $region36
        $region35: #{tpu_custom_call.1} parent=27 // pred_region
          %p203 = scmp.lt.s32.totalorder %s15, 1
          %s204 = scalar_select %p203, %s15, 1
          %s205 = smul.addr %s204, 8
          %s206 = scalar_lea.vmem %s4, %s205
        $region36: #{tpu_custom_call.1} parent=27 // pred_fallthru
          _
      $region28: #{tpu_custom_call.1} parent=5 // pred_fallthru
        _
      %p207 = scmp.le.s32.totalorder 1, %s15
      %p208 = scmp.lt.s32.totalorder %s15, 3
      %p209 = pnand %p207, %p208
      %p210 = pneg %p209
      // Predicated region
      $region37: #{tpu_custom_call.1} parent=5 // pred_check
        _
      $region38: #{tpu_custom_call.1} parent=5 // pred_check_branch
        %212 = sbr.rel (%p209) target = $region40
      $region39: #{tpu_custom_call.1} parent=5 // pred_region
        %s213 = ssub.s32 %s15, 1
        %s214 = sand.u32 %s91, 1
        %s215 = scalar_lea.sflag [#allocation4], %s214
        %s216 = sand.u32 %s91, 1
        %s217 = smul.addr %s216, 128
        %s218 = scalar_lea.vmem [#allocation3], %s217
        // Predicated region
        $region41: #{tpu_custom_call.1} parent=39 // pred_check
          %p219 = pneg %p104
        $region42: #{tpu_custom_call.1} parent=39 // pred_check_branch
          %221 = sbr.rel (%p219) target = $region44
        $region43: #{tpu_custom_call.1} parent=39 // pred_region
          %222 = dma.done %s215, 2048
        $region44: #{tpu_custom_call.1} parent=39 // pred_fallthru
          _
        %p223 = pneg %p36
        %p224 = pneg %p33
        %p225 = pneg %p57
        %p226 = pneg %p54
        %p227 = pneg %p78
        %p228 = pneg %p75
        %s229 = sand.u32 %s91, 1
        %s230 = scalar_lea.sflag [#allocation4], %s229
        %s231 = sand.u32 %s91, 1
        %s232 = smul.addr %s231, 128
        %s233 = scalar_lea.vmem [#allocation3], %s232
        %p234 = pneg %p104
        %p235 = pneg %p101
        %p236 = scmp.lt.s32.totalorder %s20, 1
        %s237 = scalar_select %p236, %s20, 1
        %s238 = smul.addr %s237, 8
        %s239 = scalar_lea.vmem %s4, %s238
        %p240 = pneg %p130
        %p241 = pneg %p127
        %p242 = pneg %p151
        %p243 = pneg %p148
        %p244 = scmp.lt.s32.totalorder %s20, 1
        %s245 = scalar_select %p244, %s20, 1
        %s246 = smul.addr %s245, 8
        %s247 = scalar_lea.vmem %s4, %s246
        %p249 = scmp.eq.s32.totalorder %s20, 0
        // Predicated region
        $region45: #{tpu_custom_call.1} parent=39 // pred_check
          %p250 = pneg %p249
        $region46: #{tpu_custom_call.1} parent=39 // pred_check_branch
          %252 = sbr.rel (%p250) target = $region48
        $region47: #{tpu_custom_call.1} parent=39 // pred_region
          %v253 = vld [vmem:[%s0] sm:$0xff]
          %v254 = vld [vmem:[%s0 + $0x8] sm:$0xff]
          %vm255 = vcmask 261120
          %256 = vst.msk [vmem:[#allocation2] sm:$0xff] %vm255, %v253
          %257 = vst.msk [vmem:[#allocation2 + $0x8] sm:$0xff] %vm255, %v254
        $region48: #{tpu_custom_call.1} parent=39 // pred_fallthru
          _
        %v258 = vld [vmem:[#allocation2] sm:$0xff]
        %v259 = vld [vmem:[#allocation2 + $0x8] sm:$0xff]
        %v260 = vpack.c.bf16 %v259, %v258
        %v261 = vld [vmem:[%s218] sm:$0xf]
        %v262 = vld [vmem:[%s218 + $0x10] sm:$0xf]
        %v263 = vld [vmem:[%s218 + $0x20] sm:$0xf]
        %v264 = vld [vmem:[%s218 + $0x30] sm:$0xf]
        %v265 = vld [vmem:[%s247] sm:$0x1]
        %v266 = vlaneseq
        %v267 = vshrl.u32 %v266, 7
        %v268 = vsub.s32 0, %v267
        %v269 = vrot.slane %v265, %v268
        %v274 = vunpack.c.l.b16 %v261
        %v275 = vunpack.c.l.b16 %v262
        %v276 = vunpack.c.l.b16 %v263
        %v277 = vunpack.c.l.b16 %v264
        %v278 = vpack.c.b16 %v275, %v274
        %v279 = vpack.c.b16 %v277, %v276
        %vm282 = vcmask 261120
        %v284 = vsel %vm282, %v260, 0
        %286 = vmatprep.subr.bf16.mxu0 0
        %287 = vmatpush1.bf16.msra.mxu0 0
        %288 = vmatprep.subr.bf16.mxu0 0
        %289 = vmatpush1.bf16.msra.mxu0 0
        %290 = vmatprep.subr.bf16.mxu0 0
        %291 = vmatpush1.bf16.msra.mxu0 0
        %292 = vmatprep.subr.bf16.mxu0 0
        %293 = vmatpush1.bf16.msra.mxu0 0
        %294 = vmatprep.subr.bf16.mxu0 0
        %295 = vmatpush1.bf16.msra.mxu0 0
        %296 = vmatprep.subr.bf16.mxu0 0
        %297 = vmatpush1.bf16.msra.mxu0 0
        %298 = vmatprep.subr.bf16.mxu0 0
        %299 = vmatpush1.bf16.msra.mxu0 %v279
        %300 = vmatprep.subr.bf16.mxu0 0
        %301 = vmatpush1.bf16.msra.mxu0 %v278
        %302 = vmatprep.subr.bf16.mxu0 0
        %303 = vmatpush2.bf16.msra.mxu0 0
        %304 = vmatprep.subr.bf16.mxu0 0
        %305 = vmatpush2.bf16.msra.mxu0 0
        %306 = vmatprep.subr.bf16.mxu0 0
        %307 = vmatpush2.bf16.msra.mxu0 0
        %308 = vmatprep.subr.bf16.mxu0 0
        %309 = vmatpush2.bf16.msra.mxu0 0
        %310 = vmatprep.subr.bf16.mxu0 0
        %311 = vmatpush2.bf16.msra.mxu0 0
        %312 = vmatprep.subr.bf16.mxu0 0
        %313 = vmatpush2.bf16.msra.mxu0 0
        %314 = vmatprep.subr.bf16.mxu0 0
        %315 = vmatpush2.bf16.msra.mxu0 0
        %316 = vmatprep.subr.bf16.mxu0 0
        %317 = vmatpush2.bf16.msra.mxu0 0
        %318 = vmatprep.mubr.bf16.mxu0 0
        %319 = vmatmul.mubr.bf16.gmra.mxu0 %v284
        %v320 = vpop.f32.mrf.mxu0
        %v321 = vadd.f32 %v269, %v320
        %v322 = vpop.f32.mrf.mxu0
        %v323 = vpop.f32.mrf.mxu0
        %v324 = vadd.f32 %v269, %v323
        %v325 = vpop.f32.mrf.mxu0
        %326 = vdwg.mxu0
        %v327 = vld [vmem:[%s2] sm:$0xf]
        %v328 = vmul.f32 %v321, 0.35355338
        %v329 = vmul.f32 %v324, 0.35355338
        %v332 = vunpack.c.l.s4 1966171168
        %v333 = vunpack.c.0.s8 %v332
        %v334 = vlaneseq
        %v335 = vshrl.u32 %v334, 7
        %v336 = vsub.s32 %v333, %v335
        %v337 = vrot.slane %v327, %v336
        %v338 = vcombine.high %v337, %v337
        %v340 = vunpack.c.l.s4 1966171168
        %v341 = vunpack.c.0.s8 %v340
        %v342 = vlaneseq
        %v343 = vshrl.u32 %v342, 7
        %v344 = vsub.s32 %v341, %v343
        %v345 = vrot.slane %v337, %v344
        %v347 = vunpack.c.l.s4 1966171168
        %v348 = vunpack.c.0.s8 %v347
        %v349 = vlaneseq
        %v350 = vshrl.u32 %v349, 7
        %v351 = vsub.s32 %v348, %v350
        %v352 = vrot.slane %v338, %v351
        %v353 = vcombine.high %v345, %v345
        %v354 = vcombine.high %v352, %v352
        %v355 = vlaneseq
        %v356 = vshrl.u32 %v355, 7
        %v357 = vsub.s32 0, %v356
        %v358 = vrot.slane %v345, %v357
        %v359 = vlaneseq
        %v360 = vshrl.u32 %v359, 7
        %v361 = vsub.s32 0, %v360
        %v362 = vrot.slane %v352, %v361
        %v363 = vlaneseq
        %v364 = vshrl.u32 %v363, 7
        %v365 = vsub.s32 0, %v364
        %v366 = vrot.slane %v353, %v365
        %v367 = vlaneseq
        %v368 = vshrl.u32 %v367, 7
        %v369 = vsub.s32 0, %v368
        %v370 = vrot.slane %v354, %v369
        %v375 = vmul.f32 %v328, %v358
        %v376 = vmul.f32 %v329, %v358
        %v377 = vmul.f32 %v328, %v362
        %v378 = vmul.f32 %v329, %v362
        %v379 = vmul.f32 %v328, %v366
        %v380 = vmul.f32 %v329, %v366
        %v381 = vmul.f32 %v328, %v370
        %v382 = vmul.f32 %v329, %v370
        %v383 = vpack.c.bf16 %v376, %v375
        %v384 = vpack.c.bf16 %v378, %v377
        %v385 = vpack.c.bf16 %v380, %v379
        %v386 = vpack.c.bf16 %v382, %v381
        %v387 = vpack.c.bf16 %v324, %v321
        %v388 = vld [vmem:[%s1] sm:$0xff]
        %v389 = vld [vmem:[%s1 + $0x8] sm:$0xff]
        %v390 = vld [vmem:[%s1 + $0x10] sm:$0xff]
        %v391 = vld [vmem:[%s1 + $0x18] sm:$0xff]
        %v392 = vld [vmem:[%s1 + $0x20] sm:$0xff]
        %v393 = vld [vmem:[%s1 + $0x28] sm:$0xff]
        %v394 = vld [vmem:[%s1 + $0x30] sm:$0xff]
        %v395 = vld [vmem:[%s1 + $0x38] sm:$0xff]
        %397 = vrot.lane.b32.xlu0 %v387, 96
        %v398 = vpop.permute.xlu0 %397
        %v400 = vsel %vm282, %v383, 0
        %v403 = vsel %vm282, %v384, 0
        %v406 = vsel %vm282, %v385, 0
        %v409 = vsel %vm282, %v386, 0
        %v412 = vsel %vm282, %v398, 0
        %414 = vmatprep.subr.bf16.mxu0 0
        %415 = vmatpush1.bf16.xpose.msra.mxu0 0
        %416 = vmatprep.subr.bf16.mxu0 0
        %417 = vmatpush1.bf16.xpose.msra.mxu0 0
        %418 = vmatprep.subr.bf16.mxu0 0
        %419 = vmatpush1.bf16.xpose.msra.mxu0 0
        %420 = vmatprep.subr.bf16.mxu0 0
        %421 = vmatpush1.bf16.xpose.msra.mxu0 0
        %422 = vmatprep.subr.bf16.mxu0 0
        %423 = vmatpush1.bf16.xpose.msra.mxu0 0
        %424 = vmatprep.subr.bf16.mxu0 0
        %425 = vmatpush1.bf16.xpose.msra.mxu0 0
        %426 = vmatprep.subr.bf16.mxu0 0
        %427 = vmatpush1.bf16.xpose.msra.mxu0 0
        %428 = vmatprep.subr.bf16.mxu0 0
        %429 = vmatpush1.bf16.xpose.msra.mxu0 %v412
        %430 = vmatprep.subr.bf16.mxu0 0
        %431 = vmatpush2.bf16.xpose.msra.mxu0 0
        %432 = vmatprep.subr.bf16.mxu0 0
        %433 = vmatpush2.bf16.xpose.msra.mxu0 0
        %434 = vmatprep.subr.bf16.mxu0 0
        %435 = vmatpush2.bf16.xpose.msra.mxu0 0
        %436 = vmatprep.subr.bf16.mxu0 0
        %437 = vmatpush2.bf16.xpose.msra.mxu0 0
        %438 = vmatprep.subr.bf16.mxu0 0
        %439 = vmatpush2.bf16.xpose.msra.mxu0 0
        %440 = vmatprep.subr.bf16.mxu0 0
        %441 = vmatpush2.bf16.xpose.msra.mxu0 0
        %442 = vmatprep.subr.bf16.mxu0 0
        %443 = vmatpush2.bf16.xpose.msra.mxu0 0
        %444 = vmatprep.subr.bf16.mxu0 0
        %445 = vmatpush2.bf16.xpose.msra.mxu0 0
        %446 = vmatprep.mubr.bf16.mxu0 0
        %447 = vmatmul.mubr.bf16.gmra.mxu0 %v400
        %v448 = vpop.f32.mrf.mxu0
        %v449 = vadd.f32 %v388, %v448
        %v450 = vpop.f32.mrf.mxu0
        %v451 = vpop.f32.mrf.mxu0
        %v452 = vadd.f32 %v389, %v451
        %v453 = vpop.f32.mrf.mxu0
        %454 = vmatprep.mubr.bf16.mxu0 0
        %455 = vmatmul.mubr.bf16.gmra.mxu0 %v403
        %v456 = vpop.f32.mrf.mxu0
        %v457 = vadd.f32 %v390, %v456
        %v458 = vpop.f32.mrf.mxu0
        %v459 = vpop.f32.mrf.mxu0
        %v460 = vadd.f32 %v391, %v459
        %v461 = vpop.f32.mrf.mxu0
        %462 = vmatprep.mubr.bf16.mxu0 0
        %463 = vmatmul.mubr.bf16.gmra.mxu0 %v406
        %v464 = vpop.f32.mrf.mxu0
        %v465 = vadd.f32 %v392, %v464
        %v466 = vpop.f32.mrf.mxu0
        %v467 = vpop.f32.mrf.mxu0
        %v468 = vadd.f32 %v393, %v467
        %v469 = vpop.f32.mrf.mxu0
        %470 = vmatprep.mubr.bf16.mxu0 0
        %471 = vmatmul.mubr.bf16.gmra.mxu0 %v409
        %v472 = vpop.f32.mrf.mxu0
        %v473 = vadd.f32 %v394, %v472
        %v474 = vpop.f32.mrf.mxu0
        %v475 = vpop.f32.mrf.mxu0
        %v476 = vadd.f32 %v395, %v475
        %v477 = vpop.f32.mrf.mxu0
        %478 = vdwg.mxu0
        %vm479 = vcmask 130048
        %v480 = vsel %vm479, %v449, -inf
        %481 = vmax.xlane.f32.xlu0 %v480
        %v482 = vpop.xlane.xlu0 %481
        %v483 = vsel %vm479, %v452, -inf
        %484 = vmax.xlane.f32.xlu0 %v483
        %v485 = vpop.xlane.xlu0 %484
        %v486 = vsel %vm479, %v457, -inf
        %487 = vmax.xlane.f32.xlu0 %v486
        %v488 = vpop.xlane.xlu0 %487
        %v489 = vsel %vm479, %v460, -inf
        %490 = vmax.xlane.f32.xlu0 %v489
        %v491 = vpop.xlane.xlu0 %490
        %v492 = vsel %vm479, %v465, -inf
        %493 = vmax.xlane.f32.xlu0 %v492
        %v494 = vpop.xlane.xlu0 %493
        %v495 = vsel %vm479, %v468, -inf
        %496 = vmax.xlane.f32.xlu0 %v495
        %v497 = vpop.xlane.xlu0 %496
        %v498 = vsel %vm479, %v473, -inf
        %499 = vmax.xlane.f32.xlu0 %v498
        %v500 = vpop.xlane.xlu0 %499
        %v501 = vsel %vm479, %v476, -inf
        %502 = vmax.xlane.f32.xlu0 %v501
        %v503 = vpop.xlane.xlu0 %502
        %v504 = vsub.f32 %v449, %v482
        %v505 = vsub.f32 %v452, %v485
        %v506 = vsub.f32 %v457, %v488
        %v507 = vsub.f32 %v460, %v491
        %v508 = vsub.f32 %v465, %v494
        %v509 = vsub.f32 %v468, %v497
        %v510 = vsub.f32 %v473, %v500
        %v511 = vsub.f32 %v476, %v503
        %v512 = vmul.f32 %v504, 1.442695
        %v513 = vpow.pop %v512
        %v514 = vmul.f32 %v505, 1.442695
        %v515 = vpow.pop %v514
        %v516 = vmul.f32 %v506, 1.442695
        %v517 = vpow.pop %v516
        %v518 = vmul.f32 %v507, 1.442695
        %v519 = vpow.pop %v518
        %v520 = vmul.f32 %v508, 1.442695
        %v521 = vpow.pop %v520
        %v522 = vmul.f32 %v509, 1.442695
        %v523 = vpow.pop %v522
        %v524 = vmul.f32 %v510, 1.442695
        %v525 = vpow.pop %v524
        %v526 = vmul.f32 %v511, 1.442695
        %v527 = vpow.pop %v526
        %v528 = vsel %vm479, %v513, 0.0
        %529 = vadd.xlane.f32.xlu0 %v528
        %v530 = vpop.xlane.xlu0 %529
        %v531 = vsel %vm479, %v515, 0.0
        %532 = vadd.xlane.f32.xlu0 %v531
        %v533 = vpop.xlane.xlu0 %532
        %v534 = vsel %vm479, %v517, 0.0
        %535 = vadd.xlane.f32.xlu0 %v534
        %v536 = vpop.xlane.xlu0 %535
        %v537 = vsel %vm479, %v519, 0.0
        %538 = vadd.xlane.f32.xlu0 %v537
        %v539 = vpop.xlane.xlu0 %538
        %v540 = vsel %vm479, %v521, 0.0
        %541 = vadd.xlane.f32.xlu0 %v540
        %v542 = vpop.xlane.xlu0 %541
        %v543 = vsel %vm479, %v523, 0.0
        %544 = vadd.xlane.f32.xlu0 %v543
        %v545 = vpop.xlane.xlu0 %544
        %v546 = vsel %vm479, %v525, 0.0
        %547 = vadd.xlane.f32.xlu0 %v546
        %v548 = vpop.xlane.xlu0 %547
        %v549 = vsel %vm479, %v527, 0.0
        %550 = vadd.xlane.f32.xlu0 %v549
        %v551 = vpop.xlane.xlu0 %550
        %v552 = vrcp.pop %v530
        %v553 = vrcp.pop %v533
        %v554 = vrcp.pop %v536
        %v555 = vrcp.pop %v539
        %v556 = vrcp.pop %v542
        %v557 = vrcp.pop %v545
        %v558 = vrcp.pop %v548
        %v559 = vrcp.pop %v551
        %v560 = vmul.f32 %v513, %v552
        %v561 = vmul.f32 %v515, %v553
        %v562 = vmul.f32 %v517, %v554
        %v563 = vmul.f32 %v519, %v555
        %v564 = vmul.f32 %v521, %v556
        %v565 = vmul.f32 %v523, %v557
        %v566 = vmul.f32 %v525, %v558
        %v567 = vmul.f32 %v527, %v559
        %v568 = vpack.c.bf16 %v561, %v560
        %v569 = vpack.c.bf16 %v563, %v562
        %v570 = vpack.c.bf16 %v565, %v564
        %v571 = vpack.c.bf16 %v567, %v566
        %572 = vrot.lane.b32.xlu0 %v387, 64
        %v573 = vpop.permute.xlu0 %572
        %v576 = vsel %vm479, %v568, 0
        %v579 = vsel %vm479, %v569, 0
        %v582 = vsel %vm479, %v570, 0
        %v585 = vsel %vm479, %v571, 0
        %587 = vmatprep.subr.bf16.mxu0 0
        %588 = vmatpush1.bf16.msra.mxu0 0
        %589 = vmatprep.subr.bf16.mxu0 0
        %590 = vmatpush1.bf16.msra.mxu0 0
        %591 = vmatprep.subr.bf16.mxu0 0
        %592 = vmatpush1.bf16.msra.mxu0 0
        %593 = vmatprep.subr.bf16.mxu0 0
        %594 = vmatpush1.bf16.msra.mxu0 0
        %595 = vmatprep.subr.bf16.mxu0 0
        %596 = vmatpush1.bf16.msra.mxu0 0
        %597 = vmatprep.subr.bf16.mxu0 0
        %598 = vmatpush1.bf16.msra.mxu0 0
        %599 = vmatprep.subr.bf16.mxu0 0
        %600 = vmatpush1.bf16.msra.mxu0 0
        %601 = vmatprep.subr.bf16.mxu0 0
        %602 = vmatpush1.bf16.msra.mxu0 %v573
        %603 = vmatprep.subr.bf16.mxu0 0
        %604 = vmatpush2.bf16.msra.mxu0 0
        %605 = vmatprep.subr.bf16.mxu0 0
        %606 = vmatpush2.bf16.msra.mxu0 0
        %607 = vmatprep.subr.bf16.mxu0 0
        %608 = vmatpush2.bf16.msra.mxu0 0
        %609 = vmatprep.subr.bf16.mxu0 0
        %610 = vmatpush2.bf16.msra.mxu0 0
        %611 = vmatprep.subr.bf16.mxu0 0
        %612 = vmatpush2.bf16.msra.mxu0 0
        %613 = vmatprep.subr.bf16.mxu0 0
        %614 = vmatpush2.bf16.msra.mxu0 0
        %615 = vmatprep.subr.bf16.mxu0 0
        %616 = vmatpush2.bf16.msra.mxu0 0
        %617 = vmatprep.subr.bf16.mxu0 0
        %618 = vmatpush2.bf16.msra.mxu0 0
        %619 = vmatprep.mubr.bf16.mxu0 0
        %620 = vmatmul.mubr.bf16.gmra.mxu0 %v576
        %v621 = vpop.f32.mrf.mxu0
        %v622 = vadd.f32 0.0, %v621
        %v623 = vpop.f32.mrf.mxu0
        %v624 = vpop.f32.mrf.mxu0
        %v625 = vadd.f32 0.0, %v624
        %v626 = vpop.f32.mrf.mxu0
        %627 = vmatprep.mubr.bf16.mxu0 0
        %628 = vmatmul.mubr.bf16.gmra.mxu0 %v579
        %v629 = vpop.f32.mrf.mxu0
        %v630 = vadd.f32 0.0, %v629
        %v631 = vpop.f32.mrf.mxu0
        %v632 = vpop.f32.mrf.mxu0
        %v633 = vadd.f32 0.0, %v632
        %v634 = vpop.f32.mrf.mxu0
        %635 = vmatprep.mubr.bf16.mxu0 0
        %636 = vmatmul.mubr.bf16.gmra.mxu0 %v582
        %v637 = vpop.f32.mrf.mxu0
        %v638 = vadd.f32 0.0, %v637
        %v639 = vpop.f32.mrf.mxu0
        %v640 = vpop.f32.mrf.mxu0
        %v641 = vadd.f32 0.0, %v640
        %v642 = vpop.f32.mrf.mxu0
        %643 = vmatprep.mubr.bf16.mxu0 0
        %644 = vmatmul.mubr.bf16.gmra.mxu0 %v585
        %v645 = vpop.f32.mrf.mxu0
        %v646 = vadd.f32 0.0, %v645
        %v647 = vpop.f32.mrf.mxu0
        %v648 = vpop.f32.mrf.mxu0
        %v649 = vadd.f32 0.0, %v648
        %v650 = vpop.f32.mrf.mxu0
        %651 = vdwg.mxu0
        %v652 = vmul.f32 %v622, %v358
        %v653 = vmul.f32 %v625, %v358
        %v654 = vmul.f32 %v630, %v362
        %v655 = vmul.f32 %v633, %v362
        %v656 = vmul.f32 %v638, %v366
        %v657 = vmul.f32 %v641, %v366
        %v658 = vmul.f32 %v646, %v370
        %v659 = vmul.f32 %v649, %v370
        %v660 = vsel %vm282, %v652, 0.0
        %v661 = vsel %vm282, %v654, 0.0
        %v662 = vadd.f32 %v660, %v661
        %v663 = vsel %vm282, %v656, 0.0
        %v664 = vadd.f32 %v662, %v663
        %v665 = vsel %vm282, %v658, 0.0
        %v666 = vadd.f32 %v664, %v665
        %v667 = vsel %vm282, %v653, 0.0
        %v668 = vsel %vm282, %v655, 0.0
        %v669 = vadd.f32 %v667, %v668
        %v670 = vsel %vm282, %v657, 0.0
        %v671 = vadd.f32 %v669, %v670
        %v672 = vsel %vm282, %v659, 0.0
        %v673 = vadd.f32 %v671, %v672
        %v674 = vld [vmem:[%s218 + $0x4] sm:$0xf]
        %v675 = vld [vmem:[%s218 + $0x14] sm:$0xf]
        %v676 = vld [vmem:[%s218 + $0x24] sm:$0xf]
        %v677 = vld [vmem:[%s218 + $0x34] sm:$0xf]
        %v678 = vld [vmem:[%s247 + $0x1] sm:$0x1]
        %v679 = vpack.c.bf16 %v673, %v666
        %v680 = vlaneseq
        %v681 = vshrl.u32 %v680, 7
        %v682 = vsub.s32 0, %v681
        %v683 = vrot.slane %v678, %v682
        %v688 = vunpack.c.l.b16 %v674
        %v689 = vunpack.c.l.b16 %v675
        %v690 = vunpack.c.l.b16 %v676
        %v691 = vunpack.c.l.b16 %v677
        %v692 = vpack.c.b16 %v689, %v688
        %v693 = vpack.c.b16 %v691, %v690
        %v697 = vsel %vm282, %v679, 0
        %699 = vmatprep.subr.bf16.mxu0 0
        %700 = vmatpush1.bf16.msra.mxu0 0
        %701 = vmatprep.subr.bf16.mxu0 0
        %702 = vmatpush1.bf16.msra.mxu0 0
        %703 = vmatprep.subr.bf16.mxu0 0
        %704 = vmatpush1.bf16.msra.mxu0 0
        %705 = vmatprep.subr.bf16.mxu0 0
        %706 = vmatpush1.bf16.msra.mxu0 0
        %707 = vmatprep.subr.bf16.mxu0 0
        %708 = vmatpush1.bf16.msra.mxu0 0
        %709 = vmatprep.subr.bf16.mxu0 0
        %710 = vmatpush1.bf16.msra.mxu0 0
        %711 = vmatprep.subr.bf16.mxu0 0
        %712 = vmatpush1.bf16.msra.mxu0 %v693
        %713 = vmatprep.subr.bf16.mxu0 0
        %714 = vmatpush1.bf16.msra.mxu0 %v692
        %715 = vmatprep.subr.bf16.mxu0 0
        %716 = vmatpush2.bf16.msra.mxu0 0
        %717 = vmatprep.subr.bf16.mxu0 0
        %718 = vmatpush2.bf16.msra.mxu0 0
        %719 = vmatprep.subr.bf16.mxu0 0
        %720 = vmatpush2.bf16.msra.mxu0 0
        %721 = vmatprep.subr.bf16.mxu0 0
        %722 = vmatpush2.bf16.msra.mxu0 0
        %723 = vmatprep.subr.bf16.mxu0 0
        %724 = vmatpush2.bf16.msra.mxu0 0
        %725 = vmatprep.subr.bf16.mxu0 0
        %726 = vmatpush2.bf16.msra.mxu0 0
        %727 = vmatprep.subr.bf16.mxu0 0
        %728 = vmatpush2.bf16.msra.mxu0 0
        %729 = vmatprep.subr.bf16.mxu0 0
        %730 = vmatpush2.bf16.msra.mxu0 0
        %731 = vmatprep.mubr.bf16.mxu0 0
        %732 = vmatmul.mubr.bf16.gmra.mxu0 %v697
        %v733 = vpop.f32.mrf.mxu0
        %v734 = vadd.f32 %v683, %v733
        %v735 = vpop.f32.mrf.mxu0
        %v736 = vpop.f32.mrf.mxu0
        %v737 = vadd.f32 %v683, %v736
        %v738 = vpop.f32.mrf.mxu0
        %739 = vdwg.mxu0
        %v740 = vadd.f32 %v258, %v734
        %v741 = vadd.f32 %v259, %v737
        %v742 = vsel %vm282, %v740, 0.0
        %743 = vadd.xlane.f32.xlu0 %v742
        %v744 = vpop.xlane.xlu0 %743
        %v745 = vsel %vm282, %v741, 0.0
        %746 = vadd.xlane.f32.xlu0 %v745
        %v747 = vpop.xlane.xlu0 %746
        %v748 = vrcp.pop 32.0
        %v749 = vmul.f32 %v744, %v748
        %v750 = vmul.f32 %v747, %v748
        %v751 = vsub.f32 %v740, %v749
        %v752 = vsub.f32 %v741, %v750
        %v753 = vmul.f32 %v751, %v751
        %v754 = vmul.f32 %v752, %v752
        %v755 = vsel %vm282, %v753, 0.0
        %756 = vadd.xlane.f32.xlu0 %v755
        %v757 = vpop.xlane.xlu0 %756
        %v758 = vsel %vm282, %v754, 0.0
        %759 = vadd.xlane.f32.xlu0 %v758
        %v760 = vpop.xlane.xlu0 %759
        %v761 = vmul.f32 %v757, %v748
        %v762 = vmul.f32 %v760, %v748
        %v763 = vld [vmem:[%s247 + $0x4] sm:$0x1]
        %v764 = vld [vmem:[%s247 + $0x5] sm:$0x1]
        %v765 = vadd.f32 %v761, 1e-05
        %v766 = vadd.f32 %v762, 1e-05
        %v767 = vrsqrt.pop %v765
        %v768 = vrsqrt.pop %v766
        %v769 = vmul.f32 %v751, %v767
        %v770 = vmul.f32 %v752, %v768
        %v771 = vlaneseq
        %v772 = vshrl.u32 %v771, 7
        %v773 = vsub.s32 0, %v772
        %v774 = vrot.slane %v763, %v773
        %v775 = vmul.f32 %v769, %v774
        %v776 = vmul.f32 %v770, %v774
        %v777 = vlaneseq
        %v778 = vshrl.u32 %v777, 7
        %v779 = vsub.s32 0, %v778
        %v780 = vrot.slane %v764, %v779
        %v781 = vadd.f32 %v775, %v780
        %v782 = vadd.f32 %v776, %v780
        %v783 = vld [vmem:[%s218 + $0x8] sm:$0xf]
        %v784 = vld [vmem:[%s218 + $0x18] sm:$0xf]
        %v785 = vld [vmem:[%s218 + $0x28] sm:$0xf]
        %v786 = vld [vmem:[%s218 + $0x38] sm:$0xf]
        %v787 = vld [vmem:[%s247 + $0x2] sm:$0x1]
        %v788 = vpack.c.bf16 %v782, %v781
        %v789 = vlaneseq
        %v790 = vshrl.u32 %v789, 7
        %v791 = vsub.s32 0, %v790
        %v792 = vrot.slane %v787, %v791
        %v797 = vunpack.c.l.b16 %v783
        %v798 = vunpack.c.l.b16 %v784
        %v799 = vunpack.c.l.b16 %v785
        %v800 = vunpack.c.l.b16 %v786
        %v801 = vpack.c.b16 %v798, %v797
        %v802 = vpack.c.b16 %v800, %v799
        %v806 = vsel %vm282, %v788, 0
        %808 = vmatprep.subr.bf16.mxu0 0
        %809 = vmatpush1.bf16.msra.mxu0 0
        %810 = vmatprep.subr.bf16.mxu0 0
        %811 = vmatpush1.bf16.msra.mxu0 0
        %812 = vmatprep.subr.bf16.mxu0 0
        %813 = vmatpush1.bf16.msra.mxu0 0
        %814 = vmatprep.subr.bf16.mxu0 0
        %815 = vmatpush1.bf16.msra.mxu0 0
        %816 = vmatprep.subr.bf16.mxu0 0
        %817 = vmatpush1.bf16.msra.mxu0 0
        %818 = vmatprep.subr.bf16.mxu0 0
        %819 = vmatpush1.bf16.msra.mxu0 0
        %820 = vmatprep.subr.bf16.mxu0 0
        %821 = vmatpush1.bf16.msra.mxu0 %v802
        %822 = vmatprep.subr.bf16.mxu0 0
        %823 = vmatpush1.bf16.msra.mxu0 %v801
        %824 = vmatprep.subr.bf16.mxu0 0
        %825 = vmatpush2.bf16.msra.mxu0 0
        %826 = vmatprep.subr.bf16.mxu0 0
        %827 = vmatpush2.bf16.msra.mxu0 0
        %828 = vmatprep.subr.bf16.mxu0 0
        %829 = vmatpush2.bf16.msra.mxu0 0
        %830 = vmatprep.subr.bf16.mxu0 0
        %831 = vmatpush2.bf16.msra.mxu0 0
        %832 = vmatprep.subr.bf16.mxu0 0
        %833 = vmatpush2.bf16.msra.mxu0 0
        %834 = vmatprep.subr.bf16.mxu0 0
        %835 = vmatpush2.bf16.msra.mxu0 0
        %836 = vmatprep.subr.bf16.mxu0 0
        %837 = vmatpush2.bf16.msra.mxu0 0
        %838 = vmatprep.subr.bf16.mxu0 0
        %839 = vmatpush2.bf16.msra.mxu0 0
        %840 = vmatprep.mubr.bf16.mxu0 0
        %841 = vmatmul.mubr.bf16.gmra.mxu0 %v806
        %v842 = vpop.f32.mrf.mxu0
        %v843 = vadd.f32 %v792, %v842
        %v844 = vpop.f32.mrf.mxu0
        %v845 = vpop.f32.mrf.mxu0
        %v846 = vadd.f32 %v792, %v845
        %v847 = vpop.f32.mrf.mxu0
        %848 = vdwg.mxu0
        %v849 = vmax.f32 %v843, 0.0
        %v850 = vmax.f32 %v846, 0.0
        %v851 = vld [vmem:[%s218 + $0xc] sm:$0xf]
        %v852 = vld [vmem:[%s218 + $0x1c] sm:$0xf]
        %v853 = vld [vmem:[%s218 + $0x2c] sm:$0xf]
        %v854 = vld [vmem:[%s218 + $0x3c] sm:$0xf]
        %v855 = vld [vmem:[%s218 + $0x4c] sm:$0xf]
        %v856 = vld [vmem:[%s218 + $0x5c] sm:$0xf]
        %v857 = vld [vmem:[%s218 + $0x6c] sm:$0xf]
        %v858 = vld [vmem:[%s218 + $0x7c] sm:$0xf]
        %v859 = vld [vmem:[%s247 + $0x3] sm:$0x1]
        %v860 = vpack.c.bf16 %v850, %v849
        %v861 = vlaneseq
        %v862 = vshrl.u32 %v861, 7
        %v863 = vsub.s32 0, %v862
        %v864 = vrot.slane %v859, %v863
        %v873 = vunpack.c.l.b16 %v851
        %v874 = vunpack.c.l.b16 %v852
        %v875 = vunpack.c.l.b16 %v853
        %v876 = vunpack.c.l.b16 %v854
        %v877 = vunpack.c.l.b16 %v855
        %v878 = vunpack.c.l.b16 %v856
        %v879 = vunpack.c.l.b16 %v857
        %v880 = vunpack.c.l.b16 %v858
        %v881 = vpack.c.b16 %v874, %v873
        %v882 = vpack.c.b16 %v876, %v875
        %v883 = vpack.c.b16 %v878, %v877
        %v884 = vpack.c.b16 %v880, %v879
        %vm889 = vcmask 523264
        %v891 = vsel %vm889, %v860, 0
        %893 = vmatprep.subr.bf16.mxu0 0
        %894 = vmatpush1.bf16.msra.mxu0 0
        %895 = vmatprep.subr.bf16.mxu0 0
        %896 = vmatpush1.bf16.msra.mxu0 0
        %897 = vmatprep.subr.bf16.mxu0 0
        %898 = vmatpush1.bf16.msra.mxu0 0
        %899 = vmatprep.subr.bf16.mxu0 0
        %900 = vmatpush1.bf16.msra.mxu0 0
        %901 = vmatprep.subr.bf16.mxu0 0
        %902 = vmatpush1.bf16.msra.mxu0 %v884
        %903 = vmatprep.subr.bf16.mxu0 0
        %904 = vmatpush1.bf16.msra.mxu0 %v883
        %905 = vmatprep.subr.bf16.mxu0 0
        %906 = vmatpush1.bf16.msra.mxu0 %v882
        %907 = vmatprep.subr.bf16.mxu0 0
        %908 = vmatpush1.bf16.msra.mxu0 %v881
        %909 = vmatprep.subr.bf16.mxu0 0
        %910 = vmatpush2.bf16.msra.mxu0 0
        %911 = vmatprep.subr.bf16.mxu0 0
        %912 = vmatpush2.bf16.msra.mxu0 0
        %913 = vmatprep.subr.bf16.mxu0 0
        %914 = vmatpush2.bf16.msra.mxu0 0
        %915 = vmatprep.subr.bf16.mxu0 0
        %916 = vmatpush2.bf16.msra.mxu0 0
        %917 = vmatprep.subr.bf16.mxu0 0
        %918 = vmatpush2.bf16.msra.mxu0 0
        %919 = vmatprep.subr.bf16.mxu0 0
        %920 = vmatpush2.bf16.msra.mxu0 0
        %921 = vmatprep.subr.bf16.mxu0 0
        %922 = vmatpush2.bf16.msra.mxu0 0
        %923 = vmatprep.subr.bf16.mxu0 0
        %924 = vmatpush2.bf16.msra.mxu0 0
        %925 = vmatprep.mubr.bf16.mxu0 0
        %926 = vmatmul.mubr.bf16.gmra.mxu0 %v891
        %v927 = vpop.f32.mrf.mxu0
        %v928 = vadd.f32 %v864, %v927
        %v929 = vpop.f32.mrf.mxu0
        %v930 = vpop.f32.mrf.mxu0
        %v931 = vadd.f32 %v864, %v930
        %v932 = vpop.f32.mrf.mxu0
        %933 = vdwg.mxu0
        %v934 = vadd.f32 %v781, %v928
        %v935 = vadd.f32 %v782, %v931
        %v936 = vsel %vm282, %v934, 0.0
        %937 = vadd.xlane.f32.xlu0 %v936
        %v938 = vpop.xlane.xlu0 %937
        %v939 = vsel %vm282, %v935, 0.0
        %940 = vadd.xlane.f32.xlu0 %v939
        %v941 = vpop.xlane.xlu0 %940
        %v942 = vmul.f32 %v938, %v748
        %v943 = vmul.f32 %v941, %v748
        %v944 = vsub.f32 %v934, %v942
        %v945 = vsub.f32 %v935, %v943
        %v946 = vmul.f32 %v944, %v944
        %v947 = vmul.f32 %v945, %v945
        %v948 = vsel %vm282, %v946, 0.0
        %949 = vadd.xlane.f32.xlu0 %v948
        %v950 = vpop.xlane.xlu0 %949
        %v951 = vsel %vm282, %v947, 0.0
        %952 = vadd.xlane.f32.xlu0 %v951
        %v953 = vpop.xlane.xlu0 %952
        %v954 = vmul.f32 %v950, %v748
        %v955 = vmul.f32 %v953, %v748
        %v956 = vld [vmem:[%s247 + $0x6] sm:$0x1]
        %v957 = vld [vmem:[%s247 + $0x7] sm:$0x1]
        %v958 = vadd.f32 %v954, 1e-05
        %v959 = vadd.f32 %v955, 1e-05
        %v960 = vrsqrt.pop %v958
        %v961 = vrsqrt.pop %v959
        %v962 = vmul.f32 %v944, %v960
        %v963 = vmul.f32 %v945, %v961
        %v964 = vlaneseq
        %v965 = vshrl.u32 %v964, 7
        %v966 = vsub.s32 0, %v965
        %v967 = vrot.slane %v956, %v966
        %v968 = vmul.f32 %v962, %v967
        %v969 = vmul.f32 %v963, %v967
        %v970 = vlaneseq
        %v971 = vshrl.u32 %v970, 7
        %v972 = vsub.s32 0, %v971
        %v973 = vrot.slane %v957, %v972
        %v974 = vadd.f32 %v968, %v973
        %v975 = vadd.f32 %v969, %v973
        %p976 = scmp.lt.s32.totalorder %s20, 1
        // Predicated region
        $region49: #{tpu_custom_call.1} parent=39 // pred_check
          %p977 = pneg %p976
        $region50: #{tpu_custom_call.1} parent=39 // pred_check_branch
          %979 = sbr.rel (%p977) target = $region52
        $region51: #{tpu_custom_call.1} parent=39 // pred_region
          %980 = vst.msk [vmem:[#allocation2] sm:$0xff] %vm282, %v974
          %981 = vst.msk [vmem:[#allocation2 + $0x8] sm:$0xff] %vm282, %v975
        $region52: #{tpu_custom_call.1} parent=39 // pred_fallthru
          _
        %p982 = scmp.eq.s32.totalorder %s20, 1
        // Predicated region
        $region53: #{tpu_custom_call.1} parent=39 // pred_check
          %p983 = pneg %p982
        $region54: #{tpu_custom_call.1} parent=39 // pred_check_branch
          %985 = sbr.rel (%p983) target = $region56
        $region55: #{tpu_custom_call.1} parent=39 // pred_region
          %986 = vst.msk [vmem:[#allocation6] sm:$0xff] %vm282, %v974
          %987 = vst.msk [vmem:[#allocation6 + $0x8] sm:$0xff] %vm282, %v975
        $region56: #{tpu_custom_call.1} parent=39 // pred_fallthru
          _
        // Predicated region
        $region57: #{tpu_custom_call.1} parent=39 // pred_check
          %p988 = pneg %p148
        $region58: #{tpu_custom_call.1} parent=39 // pred_check_branch
          %990 = sbr.rel (%p988) target = $region60
        $region59: #{tpu_custom_call.1} parent=39 // pred_region
          %s992 = ssub.s32 256, 256
          %993 = vsyncadd [#allocation5], %s992
          %s994 = sshll.u32 [#allocation6], 4
          %s995 = int_to_ptr.vmem [resolvable:$true] %s994
          %1000 = dma.vmem_to_hbm [thread:$0]  %s995, 256, %s5, [#allocation5], 128, 128, 8
        $region60: #{tpu_custom_call.1} parent=39 // pred_fallthru
          _
        // Predicated region
        $region61: #{tpu_custom_call.1} parent=39 // pred_check
          %p1001 = pneg %p148
        $region62: #{tpu_custom_call.1} parent=39 // pred_check_branch
          %1003 = sbr.rel (%p1001) target = $region64
        $region63: #{tpu_custom_call.1} parent=39 // pred_region
          %1004 = dma.done [#allocation5], 256
        $region64: #{tpu_custom_call.1} parent=39 // pred_fallthru
          _
      $region40: #{tpu_custom_call.1} parent=5 // pred_fallthru
        _
      %p1005 = scmp.le.s32.totalorder 2, %s15
      // Predicated region
      $region65: #{tpu_custom_call.1} parent=5 // pred_check
        %p1006 = pneg %p1005
      $region66: #{tpu_custom_call.1} parent=5 // pred_check_branch
        %1008 = sbr.rel (%p1006) target = $region68
      $region67: #{tpu_custom_call.1} parent=5 // pred_region
        %s1009 = ssub.s32 %s15, 2
      $region68: #{tpu_custom_call.1} parent=5 // pred_fallthru
        _
    $region6: #{tpu_custom_call.1} parent=1 // loop_footer
      %s19 = sadd.s32 1, %s15
    $region7: #{tpu_custom_call.1} parent=1 // loop_footer_branch
      %14 = sbr.rel target = $region3
    $region8: #{tpu_custom_call.1} parent=1 // loop_exit
      _
    %1010 = vsyncpa [#allocation4], 1
    %s1011 = scalar_lea.sflag [#allocation4], 1
    %1012 = vsyncpa %s1011, 1
    %1013 = vsyncpa [#allocation5], 1
    %s1014 = scalar_lea.sflag [#allocation5], 1
    %1015 = vsyncpa %s1014, 1

</llo_original>
